<compile_context>
chip_gen: v7x
topology: tpu7x:2x2x1
jax: 0.10.0
libtpu: 0.0.40
codegen_flags: <defaults>
</compile_context>

<pallas_src>
import functools

import jax
import jax.numpy as jnp
from jax.experimental import pallas as pl
from jax.experimental.pallas import tpu as pltpu


def _round_up(x, m):
    return (x + m - 1) // m * m


def _vmem_budget():
    """(tiling_budget_bytes, vmem_limit_bytes), generation-aware."""
    cap = 64 * 1024 * 1024  # conservative fallback (v7x per-TC VMEM)
    try:
        info = pltpu.get_tpu_info()
        cap = int(getattr(info, "vmem_capacity_bytes", cap)) or cap
    except Exception:
        pass
    tiling = (cap * 3) // 4                       # leave headroom for compiler scratch
    limit = min((cap * 17) // 20, cap - (4 << 20))
    return tiling, max(limit, 16 << 20)


def _choose_tm(n_rows, K, D, align_rows, vmem_budget):
    """Largest aligned row tile whose working set fits the VMEM budget."""
    best = align_rows
    for cand in (8192, 4096, 2048, 1024, 512, 256, 128):
        tm = _round_up(cand, align_rows)
        need = (
            3 * tm * D * 4            # packed x input, 3-deep buffered
            + 2 * tm * D * 4          # packed q output, double buffered
            + 3 * K * D * 4           # f32 codebook + in-kernel bf16 hi/lo
            + 2 * max(K, 128) * 4     # ||e||^2
            + 12 * tm * K             # (tm, K) distance / iota / one-hot temporaries
            + 16 * tm * D             # unpacked x / q / diff temporaries
        )
        if need <= vmem_budget:
            best = tm
            break
    # never tile wider than the (row-padded) problem
    best = min(best, _round_up(max(n_rows, 1), align_rows))
    # keep >= 2 tiles when possible so the "parallel" axis can shard across
    # v7x's two TensorCores
    if n_rows > align_rows:
        best = min(best, _round_up((n_rows + 1) // 2, align_rows))
    return best


def _bspec(shape, index_map, buffers=None):
    """BlockSpec with an optional pipeline-depth hint (graceful fallback)."""
    if buffers is None:
        return pl.BlockSpec(shape, index_map)
    try:
        return pl.BlockSpec(shape, index_map, pipeline_mode=pl.Buffered(buffers))
    except TypeError:
        return pl.BlockSpec(shape, index_map)


def _vq_kernel(xp_ref, esq_ref, emb_ref, qp_ref, psum_ref, *, D, G, n_valid):
    """One row-tile of flattened latents vs. the full codebook.

    xp_ref  : (tm_p, G*D) lane-packed latent rows (f32); tm_p = tm // G
    esq_ref : (1, K)      precomputed ||e_k||^2 (f32)
    emb_ref : (K, D)      f32 codebook (bf16 copies derived in-kernel)
    qp_ref  : (tm_p, G*D) lane-packed quantized rows out (f32)
    psum_ref: (1, G*D)    per-tile per-lane squared-error partial sums
    """
    tm_p, lanes = xp_ref.shape
    tm = tm_p * G

    xp = xp_ref[...]                                   # lane-dense load

    # Unpack G original rows per stored row (static lane slices + sublane
    # concat; internal row order is g-major, repacked consistently below).
    if G > 1:
        x = jnp.concatenate(
            [xp[:, g * D:(g + 1) * D] for g in range(G)], axis=0)   # (tm, D)
    else:
        x = xp

    # Per-tile bf16 hi/lo split of the single resident f32 codebook (VPU cast,
    # negligible vs. the matmuls).
    e = emb_ref[...]                                   # (K, D) f32
    e_hi = e.astype(jnp.bfloat16)
    e_lo = (e - e_hi.astype(jnp.float32)).astype(jnp.bfloat16)

    # Distance up to the row-constant ||x||^2 (cannot change the per-row argmin):
    #   dist_k = ||e_k||^2 - 2 x . e_k          (bf16 MXU, f32 accumulation)
    xe = jax.lax.dot_general(
        x.astype(jnp.bfloat16), e_hi,
        dimension_numbers=(((1,), (1,)), ((), ())),
        preferred_element_type=jnp.float32)            # (tm, K)
    dist = esq_ref[...] - 2.0 * xe

    # argmin along K with first-occurrence tie-breaking (matches torch.argmin).
    K = dist.shape[1]
    min_d = jnp.min(dist, axis=1, keepdims=True)       # (tm, 1)
    lane_iota = jax.lax.broadcasted_iota(jnp.int32, dist.shape, 1)
    inds = jnp.min(jnp.where(dist == min_d, lane_iota, K), axis=1, keepdims=True)

    # one-hot gather on the MXU: exact 0/1 bf16 one-hot times hi/lo bf16 halves
    # (2 bf16 passes, ~f32-accurate; avoids the multi-pass f32 matmul).
    one_hot = (lane_iota == inds).astype(jnp.bfloat16)  # (tm, K)
    q = (jnp.dot(one_hot, e_hi, preferred_element_type=jnp.float32)
         + jnp.dot(one_hot, e_lo, preferred_element_type=jnp.float32))  # (tm, D)

    # Re-pack to the lane-dense layout for an unmasked store + dense DMA out.
    if G > 1:
        qp = jnp.concatenate(
            [q[g * tm_p:(g + 1) * tm_p, :] for g in range(G)], axis=1)
    else:
        qp = q
    qp_ref[...] = qp

    # Per-tile, per-lane squared-error partial sums (mask padded rows if any).
    diff = qp - xp
    if n_valid is not None:
        sub = jax.lax.broadcasted_iota(jnp.int32, (tm_p, lanes), 0)
        lane = jax.lax.broadcasted_iota(jnp.int32, (tm_p, lanes), 1)
        orig_row = pl.program_id(0) * tm + sub * G + lane // D
        diff = jnp.where(orig_row < n_valid, diff, 0.0)
    psum_ref[...] = jnp.sum(diff * diff, axis=0, keepdims=True)   # (1, lanes)


@functools.partial(jax.jit, static_argnames=("beta", "tm", "pipeline_hints"))
def _vq_forward_impl(latents, embedding, *, beta, tm, pipeline_hints):
    latents = latents.astype(jnp.float32)
    embedding = embedding.astype(jnp.float32)
    orig_shape = latents.shape
    K, D = embedding.shape

    flat = latents.reshape(-1, D)
    N = flat.shape[0]

    # Lane packing: G original rows per stored row so IO uses all 128 lanes.
    G = 128 // D if (D < 128 and 128 % D == 0) else 1
    lanes = G * D
    # keep tm_p = tm // G a multiple of 8 (sublane alignment) and tm of 128
    align_rows = max(128, (8 * 128) // D) if G > 1 else 128

    tiling_budget, vmem_limit = _vmem_budget()
    if tm is None:
        tm = _choose_tm(N, K, D, align_rows, tiling_budget)
    else:
        tm = _round_up(int(tm), align_rows)

    n_pad = _round_up(N, tm)
    if n_pad != N:
        flat = jnp.pad(flat, ((0, n_pad - N), (0, 0)))
    num_tiles = n_pad // tm
    tm_p = tm // G

    flat_p = flat.reshape(n_pad // G, lanes)            # pure row-major reshape

    # hoisted one-time codebook work (single f32 codebook stream into kernel)
    e_sq = jnp.sum(embedding * embedding, axis=1)[None, :]          # (1, K)

    kernel = functools.partial(_vq_kernel, D=D, G=G,
                               n_valid=(None if n_pad == N else N))

    x_buffers = 3 if pipeline_hints else None
    const_buffers = 1 if pipeline_hints else None

    flops = 6 * n_pad * K * D                     # distance + 2-pass gather matmuls
    bytes_accessed = (2 * n_pad * D * 4           # packed x in, packed q out
                      + K * D * 4 + K * 4         # codebook + ||e||^2
                      + num_tiles * lanes * 4)    # loss partials

    q_p, partials = pl.pallas_call(
        kernel,
        out_shape=(
            jax.ShapeDtypeStruct((n_pad // G, lanes), jnp.float32),
            jax.ShapeDtypeStruct((num_tiles, lanes), jnp.float32),
        ),
        grid_spec=pltpu.PrefetchScalarGridSpec(
            num_scalar_prefetch=0,
            grid=(num_tiles,),
            in_specs=[
                _bspec((tm_p, lanes), lambda i: (i, 0), buffers=x_buffers),
                _bspec((1, K), lambda i: (0, 0), buffers=const_buffers),
                _bspec((K, D), lambda i: (0, 0), buffers=const_buffers),
            ],
            out_specs=[
                pl.BlockSpec((tm_p, lanes), lambda i: (i, 0)),   # packed q rows
                pl.BlockSpec((1, lanes), lambda i: (i, 0)),      # loss partials
            ],
        ),
        compiler_params=pltpu.CompilerParams(
            dimension_semantics=("parallel",),   # no carried state -> megacore-shardable
            vmem_limit_bytes=vmem_limit,
        ),
        cost_estimate=pl.CostEstimate(
            flops=flops, transcendentals=0, bytes_accessed=bytes_accessed),
    )(flat_p, e_sq, embedding)

    sq_sum = jnp.sum(partials)                    # per-tile, per-lane partials
    mse = sq_sum / jnp.float32(N * D)
    # commitment_loss * beta + embedding_loss; identical forward value.
    vq_loss = mse * beta + mse

    q = q_p.reshape(n_pad, D)[:N].reshape(orig_shape)
    # straight-through estimator (forward value == q)
    quantized = latents + jax.lax.stop_gradient(q - latents)
    return quantized, vq_loss


def vector_quantizer_forward(latents, embedding, *, beta=0.25, tm=None):
    """latents: (..., D) float32, embedding: (K, D) float32."""
    try:
        return _vq_forward_impl(latents, embedding, beta=beta, tm=tm,
                                pipeline_hints=True)
    except Exception:
        # Fallback without pipeline-depth hints if the installed Pallas
        # rejects pipeline_mode on this path.
        return _vq_forward_impl(latents, embedding, beta=beta, tm=tm,
                                pipeline_hints=False)


def _reference(latents, embedding, beta=0.25):
    """Pure-JAX f32 reference mirroring the PyTorch forward."""
    D = embedding.shape[1]
    shape = latents.shape
    flat = latents.reshape(-1, D)
    dist = (jnp.sum(flat ** 2, axis=1, keepdims=True)
            + jnp.sum(embedding ** 2, axis=1)
            - 2.0 * jnp.matmul(flat, embedding.T,
                               precision=jax.lax.Precision.HIGHEST))
    inds = jnp.argmin(dist, axis=1)
    q = embedding[inds].reshape(shape)
    mse = jnp.mean((q - latents) ** 2)
    vq_loss = mse * beta + mse
    quantized = latents + jax.lax.stop_gradient(q - latents)
    return quantized, vq_loss


def _check(latents, embedding, quantized, vq_loss, beta):
    D = embedding.shape[1]
    q_ref, loss_ref = _reference(latents, embedding, beta=beta)
    flat = latents.reshape(-1, D).astype(jnp.float32)
    qk = quantized.reshape(-1, D).astype(jnp.float32)

    assert quantized.shape == latents.shape and quantized.dtype == jnp.float32

    # 1) kernel's pick must be (near-)nearest in true f32 distance; bf16 MXU
    #    rounding may flip genuine near-ties, so compare with a tolerance.
    d_true = (jnp.sum(flat ** 2, axis=1, keepdims=True)
              + jnp.sum(embedding ** 2, axis=1)
              - 2.0 * jnp.matmul(flat, embedding.T,
                                 precision=jax.lax.Precision.HIGHEST))
    d_min = jnp.min(d_true, axis=1)
    d_chosen = jnp.sum((flat - qk) ** 2, axis=1)
    assert bool(jnp.all(d_chosen <= d_min + 5e-3))

    # 2) the vast majority of rows agree exactly with the f32 reference
    row_match = jnp.all(jnp.abs(qk - q_ref.reshape(-1, D)) < 1e-3, axis=1)
    assert float(jnp.mean(row_match)) >= 0.8

    # 3) loss matches the reference closely
    assert bool(jnp.allclose(vq_loss, loss_ref, rtol=1e-3, atol=1e-5))


if __name__ == "__main__":
    key = jax.random.PRNGKey(0)
    k_lat, k_emb, k_lat2 = jax.random.split(key, 3)

    # small shapes: batch=2, spatial=8x8, embedding_dim D=32, codebook K=64
    B, H, W, D, K = 2, 8, 8, 32, 64
    beta = 0.25

    latents = jax.random.normal(k_lat, (B, H, W, D), dtype=jnp.float32)
    # nn.Embedding(K, D).weight.data.uniform_(-1/K, 1/K)
    embedding = jax.random.uniform(
        k_emb, (K, D), dtype=jnp.float32, minval=-1.0 / K, maxval=1.0 / K)

    quantized, vq_loss = vector_quantizer_forward(latents, embedding, beta=beta)
    jax.block_until_ready((quantized, vq_loss))
    _check(latents, embedding, quantized, vq_loss, beta)

    # second case: row count not a multiple of the tile -> exercises the
    # padding + loss-mask path and a multi-tile "parallel" grid.
    latents2 = jax.random.normal(k_lat2, (2, 9, 8, D), dtype=jnp.float32)
    q2, loss2 = vector_quantizer_forward(latents2, embedding, beta=beta, tm=128)
    jax.block_until_ready((q2, loss2))
    _check(latents2, embedding, q2, loss2, beta)

    print("KERNEL_OK")
</pallas_src>

<mosaic_0001>
module attributes {stable_mosaic.version = 11 : i64} {
  func.func @_vq_kernel(%arg0: i32, %arg1: memref<32x128xf32, #tpu.memory_space<vmem>>, %arg2: memref<1x64xf32, #tpu.memory_space<vmem>>, %arg3: memref<64x32xf32, #tpu.memory_space<vmem>>, %arg4: memref<32x128xf32, #tpu.memory_space<vmem>>, %arg5: memref<1x128xf32, #tpu.memory_space<vmem>>) attributes {dimension_semantics = [#tpu.dimension_semantics<parallel>], iteration_bounds = array<i64: 1>, scalar_prefetch = 0 : i64, scratch_operands = 0 : i64, tpu.core_type = #tpu.core_type<tc>, window_params = [{transform_indices = @transform_0, window_bounds = array<i64: 32, 128>}, {pipeline_mode = #tpu.pipeline_mode<synchronous>, transform_indices = @transform_1, window_bounds = array<i64: 1, 64>}, {pipeline_mode = #tpu.pipeline_mode<synchronous>, transform_indices = @transform_2, window_bounds = array<i64: 64, 32>}, {transform_indices = @transform_3, window_bounds = array<i64: 32, 128>}, {transform_indices = @transform_4, window_bounds = array<i64: 1, 128>}]} {
    %c0 = arith.constant 0 : index
    %c0_0 = arith.constant 0 : index
    %0 = vector.load %arg1[%c0, %c0_0] : memref<32x128xf32, #tpu.memory_space<vmem>>, vector<32x128xf32>
    %1 = vector.extract_strided_slice %0 {offsets = [0, 0], sizes = [32, 32], strides = [1, 1]} : vector<32x128xf32> to vector<32x32xf32>
    %2 = vector.extract_strided_slice %0 {offsets = [0, 32], sizes = [32, 32], strides = [1, 1]} : vector<32x128xf32> to vector<32x32xf32>
    %3 = vector.extract_strided_slice %0 {offsets = [0, 64], sizes = [32, 32], strides = [1, 1]} : vector<32x128xf32> to vector<32x32xf32>
    %4 = vector.extract_strided_slice %0 {offsets = [0, 96], sizes = [32, 32], strides = [1, 1]} : vector<32x128xf32> to vector<32x32xf32>
    %5 = tpu.concatenate %1, %2, %3, %4 in 0 : vector<32x32xf32>, vector<32x32xf32>, vector<32x32xf32>, vector<32x32xf32> -> vector<128x32xf32>
    %c0_1 = arith.constant 0 : index
    %c0_2 = arith.constant 0 : index
    %6 = vector.load %arg3[%c0_1, %c0_2] : memref<64x32xf32, #tpu.memory_space<vmem>>, vector<64x32xf32>
    %7 = arith.truncf %6 : vector<64x32xf32> to vector<64x32xbf16>
    %8 = arith.extf %7 : vector<64x32xbf16> to vector<64x32xf32>
    %9 = arith.subf %6, %8 : vector<64x32xf32>
    %10 = arith.truncf %9 : vector<64x32xf32> to vector<64x32xbf16>
    %11 = arith.truncf %5 : vector<128x32xf32> to vector<128x32xbf16>
    %cst = arith.constant dense<0.000000e+00> : vector<128x64xf32>
    %12 = tpu.matmul %11, %7, %cst {dimension_numbers = #tpu.dot_dimension_numbers<[1], [1], [0], [0], [0, 0, 1, 0], [], []>} : vector<128x32xbf16>, vector<64x32xbf16>, vector<128x64xf32> -> vector<128x64xf32>
    %c0_3 = arith.constant 0 : index
    %c0_4 = arith.constant 0 : index
    %13 = vector.load %arg2[%c0_3, %c0_4] : memref<1x64xf32, #tpu.memory_space<vmem>>, vector<1x64xf32>
    %cst_5 = arith.constant 2.000000e+00 : f32
    %14 = vector.broadcast %cst_5 : f32 to vector<128x64xf32>
    %15 = arith.mulf %14, %12 : vector<128x64xf32>
    %16 = vector.broadcast %13 : vector<1x64xf32> to vector<128x64xf32>
    %17 = arith.subf %16, %15 : vector<128x64xf32>
    %cst_6 = arith.constant dense<0x7F800000> : vector<128xf32>
    %18 = vector.multi_reduction <minimumf>, %17, %cst_6 [1] : vector<128x64xf32> to vector<128xf32>
    %19 = vector.shape_cast %18 : vector<128xf32> to vector<128x1xf32>
    %20 = tpu.iota {dimensions = array<i32: 1>} : vector<128x64xi32>
    %21 = vector.broadcast %19 : vector<128x1xf32> to vector<128x64xf32>
    %22 = arith.cmpf oeq, %17, %21 : vector<128x64xf32>
    %c64_i32 = arith.constant 64 : i32
    %23 = vector.broadcast %c64_i32 : i32 to vector<128x64xi32>
    %24 = arith.select %22, %20, %23 : vector<128x64xi1>, vector<128x64xi32>
    %cst_7 = arith.constant dense<2147483647> : vector<128xi32>
    %25 = vector.multi_reduction <minsi>, %24, %cst_7 [1] : vector<128x64xi32> to vector<128xi32>
    %26 = vector.shape_cast %25 : vector<128xi32> to vector<128x1xi32>
    %27 = vector.broadcast %26 : vector<128x1xi32> to vector<128x64xi32>
    %28 = arith.cmpi eq, %20, %27 : vector<128x64xi32>
    %29 = arith.extui %28 : vector<128x64xi1> to vector<128x64xi32>
    %30 = arith.sitofp %29 : vector<128x64xi32> to vector<128x64xf32>
    %31 = arith.truncf %30 : vector<128x64xf32> to vector<128x64xbf16>
    %cst_8 = arith.constant dense<0.000000e+00> : vector<128x32xf32>
    %32 = tpu.matmul %31, %7, %cst_8 {dimension_numbers = #tpu.dot_dimension_numbers<[1], [0], [0], [1], [0, 0, 1, 1], [], []>} : vector<128x64xbf16>, vector<64x32xbf16>, vector<128x32xf32> -> vector<128x32xf32>
    %cst_9 = arith.constant dense<0.000000e+00> : vector<128x32xf32>
    %33 = tpu.matmul %31, %10, %cst_9 {dimension_numbers = #tpu.dot_dimension_numbers<[1], [0], [0], [1], [0, 0, 1, 1], [], []>} : vector<128x64xbf16>, vector<64x32xbf16>, vector<128x32xf32> -> vector<128x32xf32>
    %34 = arith.addf %32, %33 : vector<128x32xf32>
    %35 = vector.extract_strided_slice %34 {offsets = [0, 0], sizes = [32, 32], strides = [1, 1]} : vector<128x32xf32> to vector<32x32xf32>
    %36 = vector.extract_strided_slice %34 {offsets = [32, 0], sizes = [32, 32], strides = [1, 1]} : vector<128x32xf32> to vector<32x32xf32>
    %37 = vector.extract_strided_slice %34 {offsets = [64, 0], sizes = [32, 32], strides = [1, 1]} : vector<128x32xf32> to vector<32x32xf32>
    %38 = vector.extract_strided_slice %34 {offsets = [96, 0], sizes = [32, 32], strides = [1, 1]} : vector<128x32xf32> to vector<32x32xf32>
    %39 = tpu.concatenate %35, %36, %37, %38 in 1 : vector<32x32xf32>, vector<32x32xf32>, vector<32x32xf32>, vector<32x32xf32> -> vector<32x128xf32>
    %c0_10 = arith.constant 0 : index
    %c0_11 = arith.constant 0 : index
    %40 = vector.load %arg4[%c0_10, %c0_11] : memref<32x128xf32, #tpu.memory_space<vmem>>, vector<32x128xf32>
    tpu.vector_store %arg4[%c0_10, %c0_11], %39 {strides = array<i32>} : memref<32x128xf32, #tpu.memory_space<vmem>>, vector<32x128xf32>,
    %41 = arith.subf %39, %0 : vector<32x128xf32>
    %42 = arith.mulf %41, %41 : vector<32x128xf32>
    %cst_12 = arith.constant dense<0.000000e+00> : vector<128xf32>
    %43 = vector.multi_reduction <add>, %42, %cst_12 [0] : vector<32x128xf32> to vector<128xf32>
    %44 = vector.shape_cast %43 : vector<128xf32> to vector<1x128xf32>
    %c0_13 = arith.constant 0 : index
    %c0_14 = arith.constant 0 : index
    %45 = vector.load %arg5[%c0_13, %c0_14] : memref<1x128xf32, #tpu.memory_space<vmem>>, vector<1x128xf32>
    tpu.vector_store %arg5[%c0_13, %c0_14], %44 {strides = array<i32>} : memref<1x128xf32, #tpu.memory_space<vmem>>, vector<1x128xf32>,
    return
  }
  func.func @transform_0(%arg0: i32) -> (i32, i32) {
    %c0_i32 = arith.constant 0 : i32
    %c0_i32_0 = arith.constant 0 : i32
    return %arg0, %c0_i32 : i32, i32
  }
  func.func @transform_1(%arg0: i32) -> (i32, i32) {
    %c0_i32 = arith.constant 0 : i32
    %c0_i32_0 = arith.constant 0 : i32
    %c0_i32_1 = arith.constant 0 : i32
    return %c0_i32, %c0_i32_0 : i32, i32
  }
  func.func @transform_2(%arg0: i32) -> (i32, i32) {
    %c0_i32 = arith.constant 0 : i32
    %c0_i32_0 = arith.constant 0 : i32
    %c0_i32_1 = arith.constant 0 : i32
    return %c0_i32, %c0_i32_0 : i32, i32
  }
  func.func @transform_3(%arg0: i32) -> (i32, i32) {
    %c0_i32 = arith.constant 0 : i32
    %c0_i32_0 = arith.constant 0 : i32
    return %arg0, %c0_i32 : i32, i32
  }
  func.func @transform_4(%arg0: i32) -> (i32, i32) {
    %c0_i32 = arith.constant 0 : i32
    %c0_i32_0 = arith.constant 0 : i32
    return %arg0, %c0_i32 : i32, i32
  }
}

</mosaic_0001>

<llo_original>
// kernel: _vq_forward_impl.1
$region0: #{_vq_forward_impl.1}
  #allocation0 [shape = 'u32[]', space=smem, size = 0x4, offset = 0x4, fixed_abs, tag = 'smem constant byte address 0x4 - core index']
  #allocation1 [shape = 'u32[144,128]{1,0:T(1,128)}', space=vmem, size = 0x12000, scoped, tag = 'internal scratch']
  %s0 = inlined_call_operand.vmem [shape: f32[32,128], index: 0, kind: input, shape index: {}]
  %s1 = inlined_call_operand.vmem [shape: f32[1,64], index: 1, kind: input, shape index: {}]
  %s2 = inlined_call_operand.vmem [shape: f32[64,32], index: 2, kind: input, shape index: {}]
  %s3 = inlined_call_operand.vmem [shape: f32[32,128], index: 3, kind: output, shape index: {0}]
  %s4 = inlined_call_operand.vmem [shape: f32[1,128], index: 4, kind: output, shape index: {1}]
  %5 = xla_tuple %s3, %s4
  %s6 = sld [smem:[#allocation0]]
  $region30: #{_vq_forward_impl.1} parent=0
    _
  %s8 = ssub.s32 1, %s6
  %s9 = scalar_select 0, %s8, %s6
  // Predicated region
  $region2: #{_vq_forward_impl.1} parent=0 // pred_check
    _
  $region3: #{_vq_forward_impl.1} parent=0 // pred_check_branch
    %11 = sbr.rel (0) target = $region5
  $region4: #{_vq_forward_impl.1} parent=0 // pred_region
    _
  $region5: #{_vq_forward_impl.1} parent=0 // pred_fallthru
    _
  // Predicated region
  $region6: #{_vq_forward_impl.1} parent=0 // pred_check
    _
  $region7: #{_vq_forward_impl.1} parent=0 // pred_check_branch
    %13 = sbr.rel (0) target = $region9
  $region8: #{_vq_forward_impl.1} parent=0 // pred_region
    _
  $region9: #{_vq_forward_impl.1} parent=0 // pred_fallthru
    _
  // Predicated region
  $region10: #{_vq_forward_impl.1} parent=0 // pred_check
    _
  $region11: #{_vq_forward_impl.1} parent=0 // pred_check_branch
    %15 = sbr.rel (0) target = $region13
  $region12: #{_vq_forward_impl.1} parent=0 // pred_region
    _
  $region13: #{_vq_forward_impl.1} parent=0 // pred_fallthru
    _
  %v17 = vld [vmem:[%s0] sm:$0xff]
  %v18 = vld [vmem:[%s0 + $0x8] sm:$0xff]
  %v19 = vld [vmem:[%s0 + $0x10] sm:$0xff]
  %v20 = vld [vmem:[%s0 + $0x18] sm:$0xff]
  %25 = vrot.lane.b32.xlu0 %v17, 96
  %v26 = vpop.permute.xlu0 %25
  %27 = vrot.lane.b32.xlu0 %v18, 96
  %v28 = vpop.permute.xlu0 %27
  %29 = vrot.lane.b32.xlu0 %v19, 96
  %v30 = vpop.permute.xlu0 %29
  %31 = vrot.lane.b32.xlu0 %v20, 96
  %v32 = vpop.permute.xlu0 %31
  %37 = vrot.lane.b32.xlu0 %v17, 64
  %v38 = vpop.permute.xlu0 %37
  %39 = vrot.lane.b32.xlu0 %v18, 64
  %v40 = vpop.permute.xlu0 %39
  %41 = vrot.lane.b32.xlu0 %v19, 64
  %v42 = vpop.permute.xlu0 %41
  %43 = vrot.lane.b32.xlu0 %v20, 64
  %v44 = vpop.permute.xlu0 %43
  %49 = vrot.lane.b32.xlu0 %v17, 32
  %v50 = vpop.permute.xlu0 %49
  %51 = vrot.lane.b32.xlu0 %v18, 32
  %v52 = vpop.permute.xlu0 %51
  %53 = vrot.lane.b32.xlu0 %v19, 32
  %v54 = vpop.permute.xlu0 %53
  %55 = vrot.lane.b32.xlu0 %v20, 32
  %v56 = vpop.permute.xlu0 %55
  %v61 = vld [vmem:[%s2] sm:$0xff]
  %v62 = vld [vmem:[%s2 + $0x8] sm:$0xff]
  %v63 = vld [vmem:[%s2 + $0x10] sm:$0xff]
  %v64 = vld [vmem:[%s2 + $0x18] sm:$0xff]
  %v65 = vld [vmem:[%s2 + $0x20] sm:$0xff]
  %v66 = vld [vmem:[%s2 + $0x28] sm:$0xff]
  %v67 = vld [vmem:[%s2 + $0x30] sm:$0xff]
  %v68 = vld [vmem:[%s2 + $0x38] sm:$0xff]
  %v69 = vpack.c.bf16 %v62, %v61
  %v70 = vpack.c.bf16 %v64, %v63
  %v71 = vpack.c.bf16 %v66, %v65
  %v72 = vpack.c.bf16 %v68, %v67
  %v73 = vunpack.c.l.bf16 %v69
  %v74 = vunpack.c.h.bf16 %v69
  %v75 = vunpack.c.l.bf16 %v70
  %v76 = vunpack.c.h.bf16 %v70
  %v77 = vunpack.c.l.bf16 %v71
  %v78 = vunpack.c.h.bf16 %v71
  %v79 = vunpack.c.l.bf16 %v72
  %v80 = vunpack.c.h.bf16 %v72
  %v81 = vsub.f32 %v61, %v73
  %v82 = vsub.f32 %v62, %v74
  %v83 = vsub.f32 %v63, %v75
  %v84 = vsub.f32 %v64, %v76
  %v85 = vsub.f32 %v65, %v77
  %v86 = vsub.f32 %v66, %v78
  %v87 = vsub.f32 %v67, %v79
  %v88 = vsub.f32 %v68, %v80
  %v89 = vpack.c.bf16 %v82, %v81
  %v90 = vpack.c.bf16 %v84, %v83
  %v91 = vpack.c.bf16 %v86, %v85
  %v92 = vpack.c.bf16 %v88, %v87
  %v93 = vpack.c.bf16 %v18, %v17
  %v94 = vpack.c.bf16 %v20, %v19
  %v95 = vpack.c.bf16 %v28, %v26
  %v96 = vpack.c.bf16 %v32, %v30
  %v97 = vpack.c.bf16 %v40, %v38
  %v98 = vpack.c.bf16 %v44, %v42
  %v99 = vpack.c.bf16 %v52, %v50
  %v100 = vpack.c.bf16 %v56, %v54
  %vm101 = vcmask 261120
  %v103 = vsel %vm101, %v93, 0
  %v106 = vsel %vm101, %v94, 0
  %v109 = vsel %vm101, %v95, 0
  %v112 = vsel %vm101, %v96, 0
  %v115 = vsel %vm101, %v97, 0
  %v118 = vsel %vm101, %v98, 0
  %v121 = vsel %vm101, %v99, 0
  %v124 = vsel %vm101, %v100, 0
  %v127 = vsel %vm101, %v69, 0
  %v130 = vsel %vm101, %v70, 0
  %v133 = vsel %vm101, %v71, 0
  %v136 = vsel %vm101, %v72, 0
  %138 = vmatprep.subr.bf16.mxu0 0
  %139 = vmatpush1.bf16.xpose.msra.mxu0 %v127
  %140 = vmatprep.subr.bf16.mxu0 0
  %141 = vmatpush1.bf16.xpose.msra.mxu0 %v130
  %142 = vmatprep.subr.bf16.mxu0 0
  %143 = vmatpush1.bf16.xpose.msra.mxu0 %v133
  %144 = vmatprep.subr.bf16.mxu0 0
  %145 = vmatpush1.bf16.xpose.msra.mxu0 %v136
  %146 = vmatprep.subr.bf16.mxu0 0
  %147 = vmatpush1.bf16.xpose.msra.mxu0 0
  %148 = vmatprep.subr.bf16.mxu0 0
  %149 = vmatpush1.bf16.xpose.msra.mxu0 0
  %150 = vmatprep.subr.bf16.mxu0 0
  %151 = vmatpush1.bf16.xpose.msra.mxu0 0
  %152 = vmatprep.subr.bf16.mxu0 0
  %153 = vmatpush1.bf16.xpose.msra.mxu0 0
  %154 = vmatprep.subr.bf16.mxu0 0
  %155 = vmatpush1.bf16.xpose.msra.mxu0 0
  %156 = vmatprep.subr.bf16.mxu0 0
  %157 = vmatpush1.bf16.xpose.msra.mxu0 0
  %158 = vmatprep.subr.bf16.mxu0 0
  %159 = vmatpush1.bf16.xpose.msra.mxu0 0
  %160 = vmatprep.subr.bf16.mxu0 0
  %161 = vmatpush1.bf16.xpose.msra.mxu0 0
  %162 = vmatprep.subr.bf16.mxu0 0
  %163 = vmatpush1.bf16.xpose.msra.mxu0 0
  %164 = vmatprep.subr.bf16.mxu0 0
  %165 = vmatpush1.bf16.xpose.msra.mxu0 0
  %166 = vmatprep.subr.bf16.mxu0 0
  %167 = vmatpush1.bf16.xpose.msra.mxu0 0
  %168 = vmatprep.subr.bf16.mxu0 0
  %169 = vmatpush1.bf16.xpose.msra.mxu0 0
  %170 = vmatprep.mubr.bf16.mxu0 0
  %171 = vmatmul.mubr.bf16.gmra.mrb[0].mxu0 %v103
  %v172 = vpop.f32.mrb[0].mxu0
  %v173 = vadd.f32 0.0, %v172
  %v174 = vpop.f32.mrb[0].mxu0
  %v175 = vpop.f32.mrb[0].mxu0
  %v176 = vadd.f32 0.0, %v175
  %v177 = vpop.f32.mrb[0].mxu0
  %178 = vmatprep.mubr.bf16.mxu0 0
  %179 = vmatmul.mubr.bf16.gmra.mrb[0].mxu0 %v106
  %v180 = vpop.f32.mrb[0].mxu0
  %v181 = vadd.f32 0.0, %v180
  %v182 = vpop.f32.mrb[0].mxu0
  %v183 = vpop.f32.mrb[0].mxu0
  %v184 = vadd.f32 0.0, %v183
  %v185 = vpop.f32.mrb[0].mxu0
  %186 = vmatprep.mubr.bf16.mxu0 0
  %187 = vmatmul.mubr.bf16.gmra.mrb[0].mxu0 %v109
  %v188 = vpop.f32.mrb[0].mxu0
  %v189 = vadd.f32 0.0, %v188
  %v190 = vpop.f32.mrb[0].mxu0
  %v191 = vpop.f32.mrb[0].mxu0
  %v192 = vadd.f32 0.0, %v191
  %v193 = vpop.f32.mrb[0].mxu0
  %194 = vmatprep.mubr.bf16.mxu0 0
  %195 = vmatmul.mubr.bf16.gmra.mrb[0].mxu0 %v112
  %v196 = vpop.f32.mrb[0].mxu0
  %v197 = vadd.f32 0.0, %v196
  %v198 = vpop.f32.mrb[0].mxu0
  %v199 = vpop.f32.mrb[0].mxu0
  %v200 = vadd.f32 0.0, %v199
  %v201 = vpop.f32.mrb[0].mxu0
  %202 = vmatprep.mubr.bf16.mxu0 0
  %203 = vmatmul.mubr.bf16.gmra.mrb[0].mxu0 %v115
  %v204 = vpop.f32.mrb[0].mxu0
  %v205 = vadd.f32 0.0, %v204
  %v206 = vpop.f32.mrb[0].mxu0
  %v207 = vpop.f32.mrb[0].mxu0
  %v208 = vadd.f32 0.0, %v207
  %v209 = vpop.f32.mrb[0].mxu0
  %210 = vmatprep.mubr.bf16.mxu0 0
  %211 = vmatmul.mubr.bf16.gmra.mrb[0].mxu0 %v118
  %v212 = vpop.f32.mrb[0].mxu0
  %v213 = vadd.f32 0.0, %v212
  %v214 = vpop.f32.mrb[0].mxu0
  %v215 = vpop.f32.mrb[0].mxu0
  %v216 = vadd.f32 0.0, %v215
  %v217 = vpop.f32.mrb[0].mxu0
  %218 = vmatprep.mubr.bf16.mxu0 0
  %219 = vmatmul.mubr.bf16.gmra.mrb[0].mxu0 %v121
  %v220 = vpop.f32.mrb[0].mxu0
  %v221 = vadd.f32 0.0, %v220
  %v222 = vpop.f32.mrb[0].mxu0
  %v223 = vpop.f32.mrb[0].mxu0
  %v224 = vadd.f32 0.0, %v223
  %v225 = vpop.f32.mrb[0].mxu0
  %226 = vmatprep.mubr.bf16.mxu0 0
  %227 = vmatmul.mubr.bf16.gmra.mrb[0].mxu0 %v124
  %v228 = vpop.f32.mrb[0].mxu0
  %v229 = vadd.f32 0.0, %v228
  %v230 = vpop.f32.mrb[0].mxu0
  %v231 = vpop.f32.mrb[0].mxu0
  %v232 = vadd.f32 0.0, %v231
  %v233 = vpop.f32.mrb[0].mxu0
  %234 = vdwg.mxu0
  %v235 = vld [vmem:[%s1] sm:$0x1]
  %v236 = vmul.f32 %v173, 2.0
  %v237 = vmul.f32 %v176, 2.0
  %v238 = vmul.f32 %v181, 2.0
  %v239 = vmul.f32 %v184, 2.0
  %v240 = vmul.f32 %v189, 2.0
  %v241 = vmul.f32 %v192, 2.0
  %v242 = vmul.f32 %v197, 2.0
  %v243 = vmul.f32 %v200, 2.0
  %v244 = vmul.f32 %v205, 2.0
  %v245 = vmul.f32 %v208, 2.0
  %v246 = vmul.f32 %v213, 2.0
  %v247 = vmul.f32 %v216, 2.0
  %v248 = vmul.f32 %v221, 2.0
  %v249 = vmul.f32 %v224, 2.0
  %v250 = vmul.f32 %v229, 2.0
  %v251 = vmul.f32 %v232, 2.0
  %v253 = vlaneseq
  %v254 = vshrl.u32 %v253, 7
  %v255 = vsub.s32 0, %v254
  %v256 = vrot.slane %v235, %v255
  %v258 = vsub.f32 %v256, %v236
  %v259 = vsub.f32 %v256, %v237
  %v260 = vsub.f32 %v256, %v238
  %v261 = vsub.f32 %v256, %v239
  %v262 = vsub.f32 %v256, %v240
  %v263 = vsub.f32 %v256, %v241
  %v264 = vsub.f32 %v256, %v242
  %v265 = vsub.f32 %v256, %v243
  %v266 = vsub.f32 %v256, %v244
  %v267 = vsub.f32 %v256, %v245
  %v268 = vsub.f32 %v256, %v246
  %v269 = vsub.f32 %v256, %v247
  %v270 = vsub.f32 %v256, %v248
  %v271 = vsub.f32 %v256, %v249
  %v272 = vsub.f32 %v256, %v250
  %v273 = vsub.f32 %v256, %v251
  %vm274 = vcmask 523264
  %v275 = vsel %vm274, %v258, inf
  %276 = vmin.xlane.f32.xlu0 %v275
  %v277 = vpop.xlane.xlu0 %276
  %v278 = vsel %vm274, %v259, inf
  %279 = vmin.xlane.f32.xlu0 %v278
  %v280 = vpop.xlane.xlu0 %279
  %v281 = vsel %vm274, %v260, inf
  %282 = vmin.xlane.f32.xlu0 %v281
  %v283 = vpop.xlane.xlu0 %282
  %v284 = vsel %vm274, %v261, inf
  %285 = vmin.xlane.f32.xlu0 %v284
  %v286 = vpop.xlane.xlu0 %285
  %v287 = vsel %vm274, %v262, inf
  %288 = vmin.xlane.f32.xlu0 %v287
  %v289 = vpop.xlane.xlu0 %288
  %v290 = vsel %vm274, %v263, inf
  %291 = vmin.xlane.f32.xlu0 %v290
  %v292 = vpop.xlane.xlu0 %291
  %v293 = vsel %vm274, %v264, inf
  %294 = vmin.xlane.f32.xlu0 %v293
  %v295 = vpop.xlane.xlu0 %294
  %v296 = vsel %vm274, %v265, inf
  %297 = vmin.xlane.f32.xlu0 %v296
  %v298 = vpop.xlane.xlu0 %297
  %v299 = vsel %vm274, %v266, inf
  %300 = vmin.xlane.f32.xlu0 %v299
  %v301 = vpop.xlane.xlu0 %300
  %v302 = vsel %vm274, %v267, inf
  %303 = vmin.xlane.f32.xlu0 %v302
  %v304 = vpop.xlane.xlu0 %303
  %v305 = vsel %vm274, %v268, inf
  %306 = vmin.xlane.f32.xlu0 %v305
  %v307 = vpop.xlane.xlu0 %306
  %v308 = vsel %vm274, %v269, inf
  %309 = vmin.xlane.f32.xlu0 %v308
  %v310 = vpop.xlane.xlu0 %309
  %v311 = vsel %vm274, %v270, inf
  %312 = vmin.xlane.f32.xlu0 %v311
  %v313 = vpop.xlane.xlu0 %312
  %v314 = vsel %vm274, %v271, inf
  %315 = vmin.xlane.f32.xlu0 %v314
  %v316 = vpop.xlane.xlu0 %315
  %v317 = vsel %vm274, %v272, inf
  %318 = vmin.xlane.f32.xlu0 %v317
  %v319 = vpop.xlane.xlu0 %318
  %v320 = vsel %vm274, %v273, inf
  %321 = vmin.xlane.f32.xlu0 %v320
  %v322 = vpop.xlane.xlu0 %321
  %v323 = vlaneseq
  %v324 = vand.u32 %v323, 127
  %vm325 = vcmp.eq.f32.partialorder %v258, %v277
  %vm326 = vcmp.eq.f32.partialorder %v259, %v280
  %vm327 = vcmp.eq.f32.partialorder %v260, %v283
  %vm328 = vcmp.eq.f32.partialorder %v261, %v286
  %vm329 = vcmp.eq.f32.partialorder %v262, %v289
  %vm330 = vcmp.eq.f32.partialorder %v263, %v292
  %vm331 = vcmp.eq.f32.partialorder %v264, %v295
  %vm332 = vcmp.eq.f32.partialorder %v265, %v298
  %vm333 = vcmp.eq.f32.partialorder %v266, %v301
  %vm334 = vcmp.eq.f32.partialorder %v267, %v304
  %vm335 = vcmp.eq.f32.partialorder %v268, %v307
  %vm336 = vcmp.eq.f32.partialorder %v269, %v310
  %vm337 = vcmp.eq.f32.partialorder %v270, %v313
  %vm338 = vcmp.eq.f32.partialorder %v271, %v316
  %vm339 = vcmp.eq.f32.partialorder %v272, %v319
  %vm340 = vcmp.eq.f32.partialorder %v273, %v322
  %v341 = vsel %vm325, %v324, 64
  %v342 = vsel %vm326, %v324, 64
  %v343 = vsel %vm327, %v324, 64
  %v344 = vsel %vm328, %v324, 64
  %v345 = vsel %vm329, %v324, 64
  %v346 = vsel %vm330, %v324, 64
  %v347 = vsel %vm331, %v324, 64
  %v348 = vsel %vm332, %v324, 64
  %v349 = vsel %vm333, %v324, 64
  %v350 = vsel %vm334, %v324, 64
  %v351 = vsel %vm335, %v324, 64
  %v352 = vsel %vm336, %v324, 64
  %v353 = vsel %vm337, %v324, 64
  %v354 = vsel %vm338, %v324, 64
  %v355 = vsel %vm339, %v324, 64
  %v356 = vsel %vm340, %v324, 64
  %v357 = vsel %vm274, %v341, 2147483647
  %v358 = vand.u32 %v357, 65535
  %v359 = vshra.s32 %v357, 16
  %v360 = vcvt.s32.f32 %v358
  %v361 = vcvt.s32.f32 %v359
  %362 = vmin.xlane.f32.xlu0 %v361
  %v363 = vpop.xlane.xlu0 %362
  %vm364 = vcmp.eq.f32.partialorder %v361, %v363
  %v365 = vsel %vm364, %v360, inf
  %366 = vmin.xlane.f32.xlu0 %v365
  %v367 = vpop.xlane.xlu0 %366
  %v368 = vcvt.f32.s32 %v367
  %v369 = vcvt.f32.s32 %v363
  %v370 = vshll.u32 %v369, 16
  %v371 = vadd.s32 %v370, %v368
  %v372 = vsel %vm274, %v342, 2147483647
  %v373 = vand.u32 %v372, 65535
  %v374 = vshra.s32 %v372, 16
  %v375 = vcvt.s32.f32 %v373
  %v376 = vcvt.s32.f32 %v374
  %377 = vmin.xlane.f32.xlu0 %v376
  %v378 = vpop.xlane.xlu0 %377
  %vm379 = vcmp.eq.f32.partialorder %v376, %v378
  %v380 = vsel %vm379, %v375, inf
  %381 = vmin.xlane.f32.xlu0 %v380
  %v382 = vpop.xlane.xlu0 %381
  %v383 = vcvt.f32.s32 %v382
  %v384 = vcvt.f32.s32 %v378
  %v385 = vshll.u32 %v384, 16
  %v386 = vadd.s32 %v385, %v383
  %v387 = vsel %vm274, %v343, 2147483647
  %v388 = vand.u32 %v387, 65535
  %v389 = vshra.s32 %v387, 16
  %v390 = vcvt.s32.f32 %v388
  %v391 = vcvt.s32.f32 %v389
  %392 = vmin.xlane.f32.xlu0 %v391
  %v393 = vpop.xlane.xlu0 %392
  %vm394 = vcmp.eq.f32.partialorder %v391, %v393
  %v395 = vsel %vm394, %v390, inf
  %396 = vmin.xlane.f32.xlu0 %v395
  %v397 = vpop.xlane.xlu0 %396
  %v398 = vcvt.f32.s32 %v397
  %v399 = vcvt.f32.s32 %v393
  %v400 = vshll.u32 %v399, 16
  %v401 = vadd.s32 %v400, %v398
  %v402 = vsel %vm274, %v344, 2147483647
  %v403 = vand.u32 %v402, 65535
  %v404 = vshra.s32 %v402, 16
  %v405 = vcvt.s32.f32 %v403
  %v406 = vcvt.s32.f32 %v404
  %407 = vmin.xlane.f32.xlu0 %v406
  %v408 = vpop.xlane.xlu0 %407
  %vm409 = vcmp.eq.f32.partialorder %v406, %v408
  %v410 = vsel %vm409, %v405, inf
  %411 = vmin.xlane.f32.xlu0 %v410
  %v412 = vpop.xlane.xlu0 %411
  %v413 = vcvt.f32.s32 %v412
  %v414 = vcvt.f32.s32 %v408
  %v415 = vshll.u32 %v414, 16
  %v416 = vadd.s32 %v415, %v413
  %v417 = vsel %vm274, %v345, 2147483647
  %v418 = vand.u32 %v417, 65535
  %v419 = vshra.s32 %v417, 16
  %v420 = vcvt.s32.f32 %v418
  %v421 = vcvt.s32.f32 %v419
  %422 = vmin.xlane.f32.xlu0 %v421
  %v423 = vpop.xlane.xlu0 %422
  %vm424 = vcmp.eq.f32.partialorder %v421, %v423
  %v425 = vsel %vm424, %v420, inf
  %426 = vmin.xlane.f32.xlu0 %v425
  %v427 = vpop.xlane.xlu0 %426
  %v428 = vcvt.f32.s32 %v427
  %v429 = vcvt.f32.s32 %v423
  %v430 = vshll.u32 %v429, 16
  %v431 = vadd.s32 %v430, %v428
  %v432 = vsel %vm274, %v346, 2147483647
  %v433 = vand.u32 %v432, 65535
  %v434 = vshra.s32 %v432, 16
  %v435 = vcvt.s32.f32 %v433
  %v436 = vcvt.s32.f32 %v434
  %437 = vmin.xlane.f32.xlu0 %v436
  %v438 = vpop.xlane.xlu0 %437
  %vm439 = vcmp.eq.f32.partialorder %v436, %v438
  %v440 = vsel %vm439, %v435, inf
  %441 = vmin.xlane.f32.xlu0 %v440
  %v442 = vpop.xlane.xlu0 %441
  %v443 = vcvt.f32.s32 %v442
  %v444 = vcvt.f32.s32 %v438
  %v445 = vshll.u32 %v444, 16
  %v446 = vadd.s32 %v445, %v443
  %v447 = vsel %vm274, %v347, 2147483647
  %v448 = vand.u32 %v447, 65535
  %v449 = vshra.s32 %v447, 16
  %v450 = vcvt.s32.f32 %v448
  %v451 = vcvt.s32.f32 %v449
  %452 = vmin.xlane.f32.xlu0 %v451
  %v453 = vpop.xlane.xlu0 %452
  %vm454 = vcmp.eq.f32.partialorder %v451, %v453
  %v455 = vsel %vm454, %v450, inf
  %456 = vmin.xlane.f32.xlu0 %v455
  %v457 = vpop.xlane.xlu0 %456
  %v458 = vcvt.f32.s32 %v457
  %v459 = vcvt.f32.s32 %v453
  %v460 = vshll.u32 %v459, 16
  %v461 = vadd.s32 %v460, %v458
  %v462 = vsel %vm274, %v348, 2147483647
  %v463 = vand.u32 %v462, 65535
  %v464 = vshra.s32 %v462, 16
  %v465 = vcvt.s32.f32 %v463
  %v466 = vcvt.s32.f32 %v464
  %467 = vmin.xlane.f32.xlu0 %v466
  %v468 = vpop.xlane.xlu0 %467
  %vm469 = vcmp.eq.f32.partialorder %v466, %v468
  %v470 = vsel %vm469, %v465, inf
  %471 = vmin.xlane.f32.xlu0 %v470
  %v472 = vpop.xlane.xlu0 %471
  %v473 = vcvt.f32.s32 %v472
  %v474 = vcvt.f32.s32 %v468
  %v475 = vshll.u32 %v474, 16
  %v476 = vadd.s32 %v475, %v473
  %v477 = vsel %vm274, %v349, 2147483647
  %v478 = vand.u32 %v477, 65535
  %v479 = vshra.s32 %v477, 16
  %v480 = vcvt.s32.f32 %v478
  %v481 = vcvt.s32.f32 %v479
  %482 = vmin.xlane.f32.xlu0 %v481
  %v483 = vpop.xlane.xlu0 %482
  %vm484 = vcmp.eq.f32.partialorder %v481, %v483
  %v485 = vsel %vm484, %v480, inf
  %486 = vmin.xlane.f32.xlu0 %v485
  %v487 = vpop.xlane.xlu0 %486
  %v488 = vcvt.f32.s32 %v487
  %v489 = vcvt.f32.s32 %v483
  %v490 = vshll.u32 %v489, 16
  %v491 = vadd.s32 %v490, %v488
  %v492 = vsel %vm274, %v350, 2147483647
  %v493 = vand.u32 %v492, 65535
  %v494 = vshra.s32 %v492, 16
  %v495 = vcvt.s32.f32 %v493
  %v496 = vcvt.s32.f32 %v494
  %497 = vmin.xlane.f32.xlu0 %v496
  %v498 = vpop.xlane.xlu0 %497
  %vm499 = vcmp.eq.f32.partialorder %v496, %v498
  %v500 = vsel %vm499, %v495, inf
  %501 = vmin.xlane.f32.xlu0 %v500
  %v502 = vpop.xlane.xlu0 %501
  %v503 = vcvt.f32.s32 %v502
  %v504 = vcvt.f32.s32 %v498
  %v505 = vshll.u32 %v504, 16
  %v506 = vadd.s32 %v505, %v503
  %v507 = vsel %vm274, %v351, 2147483647
  %v508 = vand.u32 %v507, 65535
  %v509 = vshra.s32 %v507, 16
  %v510 = vcvt.s32.f32 %v508
  %v511 = vcvt.s32.f32 %v509
  %512 = vmin.xlane.f32.xlu0 %v511
  %v513 = vpop.xlane.xlu0 %512
  %vm514 = vcmp.eq.f32.partialorder %v511, %v513
  %v515 = vsel %vm514, %v510, inf
  %516 = vmin.xlane.f32.xlu0 %v515
  %v517 = vpop.xlane.xlu0 %516
  %v518 = vcvt.f32.s32 %v517
  %v519 = vcvt.f32.s32 %v513
  %v520 = vshll.u32 %v519, 16
  %v521 = vadd.s32 %v520, %v518
  %v522 = vsel %vm274, %v352, 2147483647
  %v523 = vand.u32 %v522, 65535
  %v524 = vshra.s32 %v522, 16
  %v525 = vcvt.s32.f32 %v523
  %v526 = vcvt.s32.f32 %v524
  %527 = vmin.xlane.f32.xlu0 %v526
  %v528 = vpop.xlane.xlu0 %527
  %vm529 = vcmp.eq.f32.partialorder %v526, %v528
  %v530 = vsel %vm529, %v525, inf
  %531 = vmin.xlane.f32.xlu0 %v530
  %v532 = vpop.xlane.xlu0 %531
  %v533 = vcvt.f32.s32 %v532
  %v534 = vcvt.f32.s32 %v528
  %v535 = vshll.u32 %v534, 16
  %v536 = vadd.s32 %v535, %v533
  %v537 = vsel %vm274, %v353, 2147483647
  %v538 = vand.u32 %v537, 65535
  %v539 = vshra.s32 %v537, 16
  %v540 = vcvt.s32.f32 %v538
  %v541 = vcvt.s32.f32 %v539
  %542 = vmin.xlane.f32.xlu0 %v541
  %v543 = vpop.xlane.xlu0 %542
  %vm544 = vcmp.eq.f32.partialorder %v541, %v543
  %v545 = vsel %vm544, %v540, inf
  %546 = vmin.xlane.f32.xlu0 %v545
  %v547 = vpop.xlane.xlu0 %546
  %v548 = vcvt.f32.s32 %v547
  %v549 = vcvt.f32.s32 %v543
  %v550 = vshll.u32 %v549, 16
  %v551 = vadd.s32 %v550, %v548
  %v552 = vsel %vm274, %v354, 2147483647
  %v553 = vand.u32 %v552, 65535
  %v554 = vshra.s32 %v552, 16
  %v555 = vcvt.s32.f32 %v553
  %v556 = vcvt.s32.f32 %v554
  %557 = vmin.xlane.f32.xlu0 %v556
  %v558 = vpop.xlane.xlu0 %557
  %vm559 = vcmp.eq.f32.partialorder %v556, %v558
  %v560 = vsel %vm559, %v555, inf
  %561 = vmin.xlane.f32.xlu0 %v560
  %v562 = vpop.xlane.xlu0 %561
  %v563 = vcvt.f32.s32 %v562
  %v564 = vcvt.f32.s32 %v558
  %v565 = vshll.u32 %v564, 16
  %v566 = vadd.s32 %v565, %v563
  %v567 = vsel %vm274, %v355, 2147483647
  %v568 = vand.u32 %v567, 65535
  %v569 = vshra.s32 %v567, 16
  %v570 = vcvt.s32.f32 %v568
  %v571 = vcvt.s32.f32 %v569
  %572 = vmin.xlane.f32.xlu0 %v571
  %v573 = vpop.xlane.xlu0 %572
  %vm574 = vcmp.eq.f32.partialorder %v571, %v573
  %v575 = vsel %vm574, %v570, inf
  %576 = vmin.xlane.f32.xlu0 %v575
  %v577 = vpop.xlane.xlu0 %576
  %v578 = vcvt.f32.s32 %v577
  %v579 = vcvt.f32.s32 %v573
  %v580 = vshll.u32 %v579, 16
  %v581 = vadd.s32 %v580, %v578
  %v582 = vsel %vm274, %v356, 2147483647
  %v583 = vand.u32 %v582, 65535
  %v584 = vshra.s32 %v582, 16
  %v585 = vcvt.s32.f32 %v583
  %v586 = vcvt.s32.f32 %v584
  %587 = vmin.xlane.f32.xlu0 %v586
  %v588 = vpop.xlane.xlu0 %587
  %vm589 = vcmp.eq.f32.partialorder %v586, %v588
  %v590 = vsel %vm589, %v585, inf
  %591 = vmin.xlane.f32.xlu0 %v590
  %v592 = vpop.xlane.xlu0 %591
  %v593 = vcvt.f32.s32 %v592
  %v594 = vcvt.f32.s32 %v588
  %v595 = vshll.u32 %v594, 16
  %v596 = vadd.s32 %v595, %v593
  %vm597 = vcmp.eq.s32.totalorder %v324, %v371
  %vm598 = vcmp.eq.s32.totalorder %v324, %v386
  %vm599 = vcmp.eq.s32.totalorder %v324, %v401
  %vm600 = vcmp.eq.s32.totalorder %v324, %v416
  %vm601 = vcmp.eq.s32.totalorder %v324, %v431
  %vm602 = vcmp.eq.s32.totalorder %v324, %v446
  %vm603 = vcmp.eq.s32.totalorder %v324, %v461
  %vm604 = vcmp.eq.s32.totalorder %v324, %v476
  %vm605 = vcmp.eq.s32.totalorder %v324, %v491
  %vm606 = vcmp.eq.s32.totalorder %v324, %v506
  %vm607 = vcmp.eq.s32.totalorder %v324, %v521
  %vm608 = vcmp.eq.s32.totalorder %v324, %v536
  %vm609 = vcmp.eq.s32.totalorder %v324, %v551
  %vm610 = vcmp.eq.s32.totalorder %v324, %v566
  %vm611 = vcmp.eq.s32.totalorder %v324, %v581
  %vm612 = vcmp.eq.s32.totalorder %v324, %v596
  %v613 = vsel %vm597, 1, 0
  %v614 = vsel %vm598, 1, 0
  %v615 = vsel %vm599, 1, 0
  %v616 = vsel %vm600, 1, 0
  %v617 = vsel %vm601, 1, 0
  %v618 = vsel %vm602, 1, 0
  %v619 = vsel %vm603, 1, 0
  %v620 = vsel %vm604, 1, 0
  %v621 = vsel %vm605, 1, 0
  %v622 = vsel %vm606, 1, 0
  %v623 = vsel %vm607, 1, 0
  %v624 = vsel %vm608, 1, 0
  %v625 = vsel %vm609, 1, 0
  %v626 = vsel %vm610, 1, 0
  %v627 = vsel %vm611, 1, 0
  %v628 = vsel %vm612, 1, 0
  %v629 = vcvt.s32.f32 %v613
  %v630 = vcvt.s32.f32 %v614
  %v631 = vcvt.s32.f32 %v615
  %v632 = vcvt.s32.f32 %v616
  %v633 = vcvt.s32.f32 %v617
  %v634 = vcvt.s32.f32 %v618
  %v635 = vcvt.s32.f32 %v619
  %v636 = vcvt.s32.f32 %v620
  %v637 = vcvt.s32.f32 %v621
  %v638 = vcvt.s32.f32 %v622
  %v639 = vcvt.s32.f32 %v623
  %v640 = vcvt.s32.f32 %v624
  %v641 = vcvt.s32.f32 %v625
  %v642 = vcvt.s32.f32 %v626
  %v643 = vcvt.s32.f32 %v627
  %v644 = vcvt.s32.f32 %v628
  %v645 = vpack.c.bf16 %v630, %v629
  %v646 = vpack.c.bf16 %v632, %v631
  %v647 = vpack.c.bf16 %v634, %v633
  %v648 = vpack.c.bf16 %v636, %v635
  %v649 = vpack.c.bf16 %v638, %v637
  %v650 = vpack.c.bf16 %v640, %v639
  %v651 = vpack.c.bf16 %v642, %v641
  %v652 = vpack.c.bf16 %v644, %v643
  %v654 = vsel %vm274, %v645, 0
  %v657 = vsel %vm274, %v646, 0
  %v660 = vsel %vm274, %v647, 0
  %v663 = vsel %vm274, %v648, 0
  %v666 = vsel %vm274, %v649, 0
  %v669 = vsel %vm274, %v650, 0
  %v672 = vsel %vm274, %v651, 0
  %v675 = vsel %vm274, %v652, 0
  %677 = vmatprep.subr.bf16.mxu0 0
  %678 = vmatpush1.bf16.msra.mxu0 %v89
  %679 = vmatprep.subr.bf16.mxu0 0
  %680 = vmatpush1.bf16.msra.mxu0 %v90
  %681 = vmatprep.subr.bf16.mxu0 0
  %682 = vmatpush1.bf16.msra.mxu0 %v91
  %683 = vmatprep.subr.bf16.mxu0 0
  %684 = vmatpush1.bf16.msra.mxu0 %v92
  %685 = vmatprep.subr.bf16.mxu0 0
  %686 = vmatpush1.bf16.msra.mxu0 0
  %687 = vmatprep.subr.bf16.mxu0 0
  %688 = vmatpush1.bf16.msra.mxu0 0
  %689 = vmatprep.subr.bf16.mxu0 0
  %690 = vmatpush1.bf16.msra.mxu0 0
  %691 = vmatprep.subr.bf16.mxu0 0
  %692 = vmatpush1.bf16.msra.mxu0 0
  %693 = vmatprep.subr.bf16.mxu0 0
  %694 = vmatpush1.bf16.msra.mxu0 0
  %695 = vmatprep.subr.bf16.mxu0 0
  %696 = vmatpush1.bf16.msra.mxu0 0
  %697 = vmatprep.subr.bf16.mxu0 0
  %698 = vmatpush1.bf16.msra.mxu0 0
  %699 = vmatprep.subr.bf16.mxu0 0
  %700 = vmatpush1.bf16.msra.mxu0 0
  %701 = vmatprep.subr.bf16.mxu0 0
  %702 = vmatpush1.bf16.msra.mxu0 0
  %703 = vmatprep.subr.bf16.mxu0 0
  %704 = vmatpush1.bf16.msra.mxu0 0
  %705 = vmatprep.subr.bf16.mxu0 0
  %706 = vmatpush1.bf16.msra.mxu0 0
  %707 = vmatprep.subr.bf16.mxu0 0
  %708 = vmatpush1.bf16.msra.mxu0 0
  %709 = vmatprep.mubr.bf16.mxu0 0
  %710 = vmatmul.mubr.bf16.gmra.mrb[0].mxu0 %v654
  %v711 = vpop.f32.mrb[0].mxu0
  %v712 = vadd.f32 0.0, %v711
  %v713 = vpop.f32.mrb[0].mxu0
  %v714 = vpop.f32.mrb[0].mxu0
  %v715 = vadd.f32 0.0, %v714
  %v716 = vpop.f32.mrb[0].mxu0
  %717 = vmatprep.mubr.bf16.mxu0 0
  %718 = vmatmul.mubr.bf16.gmra.mrb[0].mxu0 %v657
  %v719 = vpop.f32.mrb[0].mxu0
  %v720 = vadd.f32 0.0, %v719
  %v721 = vpop.f32.mrb[0].mxu0
  %v722 = vpop.f32.mrb[0].mxu0
  %v723 = vadd.f32 0.0, %v722
  %v724 = vpop.f32.mrb[0].mxu0
  %725 = vmatprep.mubr.bf16.mxu0 0
  %726 = vmatmul.mubr.bf16.gmra.mrb[0].mxu0 %v660
  %v727 = vpop.f32.mrb[0].mxu0
  %v728 = vadd.f32 0.0, %v727
  %v729 = vpop.f32.mrb[0].mxu0
  %v730 = vpop.f32.mrb[0].mxu0
  %v731 = vadd.f32 0.0, %v730
  %v732 = vpop.f32.mrb[0].mxu0
  %733 = vmatprep.mubr.bf16.mxu0 0
  %734 = vmatmul.mubr.bf16.gmra.mrb[0].mxu0 %v663
  %v735 = vpop.f32.mrb[0].mxu0
  %v736 = vadd.f32 0.0, %v735
  %v737 = vpop.f32.mrb[0].mxu0
  %v738 = vpop.f32.mrb[0].mxu0
  %v739 = vadd.f32 0.0, %v738
  %v740 = vpop.f32.mrb[0].mxu0
  %741 = vmatprep.mubr.bf16.mxu0 0
  %742 = vmatmul.mubr.bf16.gmra.mrb[0].mxu0 %v666
  %v743 = vpop.f32.mrb[0].mxu0
  %v744 = vadd.f32 0.0, %v743
  %v745 = vpop.f32.mrb[0].mxu0
  %v746 = vpop.f32.mrb[0].mxu0
  %v747 = vadd.f32 0.0, %v746
  %v748 = vpop.f32.mrb[0].mxu0
  %749 = vmatprep.mubr.bf16.mxu0 0
  %750 = vmatmul.mubr.bf16.gmra.mrb[0].mxu0 %v669
  %v751 = vpop.f32.mrb[0].mxu0
  %v752 = vadd.f32 0.0, %v751
  %v753 = vpop.f32.mrb[0].mxu0
  %v754 = vpop.f32.mrb[0].mxu0
  %v755 = vadd.f32 0.0, %v754
  %v756 = vpop.f32.mrb[0].mxu0
  %757 = vmatprep.mubr.bf16.mxu0 0
  %758 = vmatmul.mubr.bf16.gmra.mrb[0].mxu0 %v672
  %v759 = vpop.f32.mrb[0].mxu0
  %v760 = vadd.f32 0.0, %v759
  %v761 = vpop.f32.mrb[0].mxu0
  %v762 = vpop.f32.mrb[0].mxu0
  %v763 = vadd.f32 0.0, %v762
  %v764 = vpop.f32.mrb[0].mxu0
  %765 = vmatprep.mubr.bf16.mxu0 0
  %766 = vmatmul.mubr.bf16.gmra.mrb[0].mxu0 %v675
  %v767 = vpop.f32.mrb[0].mxu0
  %v768 = vadd.f32 0.0, %v767
  %v769 = vpop.f32.mrb[0].mxu0
  %v770 = vpop.f32.mrb[0].mxu0
  %v771 = vadd.f32 0.0, %v770
  %v772 = vpop.f32.mrb[0].mxu0
  %773 = vdwg.mxu0
  %774 = vmatprep.subr.bf16.mxu0 0
  %775 = vmatpush1.bf16.msra.mxu0 %v69
  %776 = vmatprep.subr.bf16.mxu0 0
  %777 = vmatpush1.bf16.msra.mxu0 %v70
  %778 = vmatprep.subr.bf16.mxu0 0
  %779 = vmatpush1.bf16.msra.mxu0 %v71
  %780 = vmatprep.subr.bf16.mxu0 0
  %781 = vmatpush1.bf16.msra.mxu0 %v72
  %782 = vmatprep.subr.bf16.mxu0 0
  %783 = vmatpush1.bf16.msra.mxu0 0
  %784 = vmatprep.subr.bf16.mxu0 0
  %785 = vmatpush1.bf16.msra.mxu0 0
  %786 = vmatprep.subr.bf16.mxu0 0
  %787 = vmatpush1.bf16.msra.mxu0 0
  %788 = vmatprep.subr.bf16.mxu0 0
  %789 = vmatpush1.bf16.msra.mxu0 0
  %790 = vmatprep.subr.bf16.mxu0 0
  %791 = vmatpush1.bf16.msra.mxu0 0
  %792 = vmatprep.subr.bf16.mxu0 0
  %793 = vmatpush1.bf16.msra.mxu0 0
  %794 = vmatprep.subr.bf16.mxu0 0
  %795 = vmatpush1.bf16.msra.mxu0 0
  %796 = vmatprep.subr.bf16.mxu0 0
  %797 = vmatpush1.bf16.msra.mxu0 0
  %798 = vmatprep.subr.bf16.mxu0 0
  %799 = vmatpush1.bf16.msra.mxu0 0
  %800 = vmatprep.subr.bf16.mxu0 0
  %801 = vmatpush1.bf16.msra.mxu0 0
  %802 = vmatprep.subr.bf16.mxu0 0
  %803 = vmatpush1.bf16.msra.mxu0 0
  %804 = vmatprep.subr.bf16.mxu0 0
  %805 = vmatpush1.bf16.msra.mxu0 0
  %806 = vmatprep.mubr.bf16.mxu0 0
  %807 = vmatmul.mubr.bf16.gmra.mrb[0].mxu0 %v654
  %v808 = vpop.f32.mrb[0].mxu0
  %v809 = vadd.f32 %v712, %v808
  %v810 = vpop.f32.mrb[0].mxu0
  %v811 = vpop.f32.mrb[0].mxu0
  %v812 = vadd.f32 %v715, %v811
  %v813 = vpop.f32.mrb[0].mxu0
  %814 = vmatprep.mubr.bf16.mxu0 0
  %815 = vmatmul.mubr.bf16.gmra.mrb[0].mxu0 %v657
  %v816 = vpop.f32.mrb[0].mxu0
  %v817 = vadd.f32 %v720, %v816
  %v818 = vpop.f32.mrb[0].mxu0
  %v819 = vpop.f32.mrb[0].mxu0
  %v820 = vadd.f32 %v723, %v819
  %v821 = vpop.f32.mrb[0].mxu0
  %822 = vmatprep.mubr.bf16.mxu0 0
  %823 = vmatmul.mubr.bf16.gmra.mrb[0].mxu0 %v660
  %v824 = vpop.f32.mrb[0].mxu0
  %v825 = vadd.f32 %v728, %v824
  %v826 = vpop.f32.mrb[0].mxu0
  %v827 = vpop.f32.mrb[0].mxu0
  %v828 = vadd.f32 %v731, %v827
  %v829 = vpop.f32.mrb[0].mxu0
  %830 = vmatprep.mubr.bf16.mxu0 0
  %831 = vmatmul.mubr.bf16.gmra.mrb[0].mxu0 %v663
  %v832 = vpop.f32.mrb[0].mxu0
  %v833 = vadd.f32 %v736, %v832
  %v834 = vpop.f32.mrb[0].mxu0
  %v835 = vpop.f32.mrb[0].mxu0
  %v836 = vadd.f32 %v739, %v835
  %v837 = vpop.f32.mrb[0].mxu0
  %838 = vmatprep.mubr.bf16.mxu0 0
  %839 = vmatmul.mubr.bf16.gmra.mrb[0].mxu0 %v666
  %v840 = vpop.f32.mrb[0].mxu0
  %v841 = vadd.f32 %v744, %v840
  %v842 = vpop.f32.mrb[0].mxu0
  %v843 = vpop.f32.mrb[0].mxu0
  %v844 = vadd.f32 %v747, %v843
  %v845 = vpop.f32.mrb[0].mxu0
  %846 = vmatprep.mubr.bf16.mxu0 0
  %847 = vmatmul.mubr.bf16.gmra.mrb[0].mxu0 %v669
  %v848 = vpop.f32.mrb[0].mxu0
  %v849 = vadd.f32 %v752, %v848
  %v850 = vpop.f32.mrb[0].mxu0
  %v851 = vpop.f32.mrb[0].mxu0
  %v852 = vadd.f32 %v755, %v851
  %v853 = vpop.f32.mrb[0].mxu0
  %854 = vmatprep.mubr.bf16.mxu0 0
  %855 = vmatmul.mubr.bf16.gmra.mrb[0].mxu0 %v672
  %v856 = vpop.f32.mrb[0].mxu0
  %v857 = vadd.f32 %v760, %v856
  %v858 = vpop.f32.mrb[0].mxu0
  %v859 = vpop.f32.mrb[0].mxu0
  %v860 = vadd.f32 %v763, %v859
  %v861 = vpop.f32.mrb[0].mxu0
  %862 = vmatprep.mubr.bf16.mxu0 0
  %863 = vmatmul.mubr.bf16.gmra.mrb[0].mxu0 %v675
  %v864 = vpop.f32.mrb[0].mxu0
  %v865 = vadd.f32 %v768, %v864
  %v866 = vpop.f32.mrb[0].mxu0
  %v867 = vpop.f32.mrb[0].mxu0
  %v868 = vadd.f32 %v771, %v867
  %v869 = vpop.f32.mrb[0].mxu0
  %870 = vdwg.mxu0
  %875 = vrot.lane.b32.xlu0 %v825, 32
  %v876 = vpop.permute.xlu0 %875
  %877 = vrot.lane.b32.xlu0 %v828, 32
  %v878 = vpop.permute.xlu0 %877
  %879 = vrot.lane.b32.xlu0 %v833, 32
  %v880 = vpop.permute.xlu0 %879
  %881 = vrot.lane.b32.xlu0 %v836, 32
  %v882 = vpop.permute.xlu0 %881
  %891 = vrot.lane.b32.xlu0 %v841, 64
  %v892 = vpop.permute.xlu0 %891
  %893 = vrot.lane.b32.xlu0 %v844, 64
  %v894 = vpop.permute.xlu0 %893
  %895 = vrot.lane.b32.xlu0 %v849, 64
  %v896 = vpop.permute.xlu0 %895
  %897 = vrot.lane.b32.xlu0 %v852, 64
  %v898 = vpop.permute.xlu0 %897
  %907 = vrot.lane.b32.xlu0 %v857, 96
  %v908 = vpop.permute.xlu0 %907
  %909 = vrot.lane.b32.xlu0 %v860, 96
  %v910 = vpop.permute.xlu0 %909
  %911 = vrot.lane.b32.xlu0 %v865, 96
  %v912 = vpop.permute.xlu0 %911
  %913 = vrot.lane.b32.xlu0 %v868, 96
  %v914 = vpop.permute.xlu0 %913
  %v919 = vsel %vm101, %v809, %v876
  %v920 = vsel %vm101, %v812, %v878
  %v921 = vsel %vm101, %v817, %v880
  %v922 = vsel %vm101, %v820, %v882
  %v923 = vsel %vm274, %v919, %v892
  %v924 = vsel %vm274, %v920, %v894
  %v925 = vsel %vm274, %v921, %v896
  %v926 = vsel %vm274, %v922, %v898
  %vm927 = vcmask 785408
  %v928 = vsel %vm927, %v923, %v908
  %v929 = vsel %vm927, %v924, %v910
  %v930 = vsel %vm927, %v925, %v912
  %v931 = vsel %vm927, %v926, %v914
  %932 = vst [vmem:[%s3] sm:$0xff] %v928
  %933 = vst [vmem:[%s3 + $0x8] sm:$0xff] %v929
  %934 = vst [vmem:[%s3 + $0x10] sm:$0xff] %v930
  %935 = vst [vmem:[%s3 + $0x18] sm:$0xff] %v931
  %v936 = vsub.f32 %v928, %v17
  %v937 = vsub.f32 %v929, %v18
  %v938 = vsub.f32 %v930, %v19
  %v939 = vsub.f32 %v931, %v20
  %v940 = vmul.f32 %v936, %v936
  %v941 = vmul.f32 %v937, %v937
  %v942 = vmul.f32 %v938, %v938
  %v943 = vmul.f32 %v939, %v939
  %v944 = vadd.f32 %v940, %v941
  %v945 = vadd.f32 %v944, %v942
  %v946 = vadd.f32 %v945, %v943
  %v947 = vrot.slane %v946, 4
  %v948 = vadd.f32 %v946, %v947
  %v949 = vrot.slane %v948, 2
  %v950 = vadd.f32 %v948, %v949
  %v951 = vrot.slane %v950, 1
  %v952 = vadd.f32 %v950, %v951
  %953 = vst [vmem:[%s4] sm:$0x1] %v952
  // Predicated region
  $region14: #{_vq_forward_impl.1} parent=0 // pred_check
    _
  $region15: #{_vq_forward_impl.1} parent=0 // pred_check_branch
    %955 = sbr.rel (0) target = $region17
  $region16: #{_vq_forward_impl.1} parent=0 // pred_region
    _
  $region17: #{_vq_forward_impl.1} parent=0 // pred_fallthru
    _
  // Predicated region
  $region18: #{_vq_forward_impl.1} parent=0 // pred_check
    _
  $region19: #{_vq_forward_impl.1} parent=0 // pred_check_branch
    %957 = sbr.rel (0) target = $region21
  $region20: #{_vq_forward_impl.1} parent=0 // pred_region
    _
  $region21: #{_vq_forward_impl.1} parent=0 // pred_fallthru
    _
  // Predicated region
  $region22: #{_vq_forward_impl.1} parent=0 // pred_check
    _
  $region23: #{_vq_forward_impl.1} parent=0 // pred_check_branch
    %959 = sbr.rel (0) target = $region25
  $region24: #{_vq_forward_impl.1} parent=0 // pred_region
    _
  $region25: #{_vq_forward_impl.1} parent=0 // pred_fallthru
    _
  // Predicated region
  $region26: #{_vq_forward_impl.1} parent=0 // pred_check
    _
  $region27: #{_vq_forward_impl.1} parent=0 // pred_check_branch
    %961 = sbr.rel (0) target = $region29
  $region28: #{_vq_forward_impl.1} parent=0 // pred_region
    _
  $region29: #{_vq_forward_impl.1} parent=0 // pred_fallthru
    _

</llo_original>
